<compile_context>
chip_gen: v6e
topology: v6e:2x2x1
jax: 0.10.0
libtpu: 0.0.40
codegen_flags: <defaults>
</compile_context>

<pallas_src>
import functools

import jax
import jax.numpy as jnp
from jax.experimental import pallas as pl
from jax.experimental.pallas import tpu as pltpu

HIDDEN = 256
LANE = 128


def _round_up(x, m):
    return (x + m - 1) // m * m


def _actor_kernel(x_ref, w1_ref, b1_ref, w2_ref, b2_ref,
                  w3_ref, b3_ref, w4_ref, b4_ref, o_ref):
    # x: (tm, S) f32 — cast to bf16 in-kernel; w*: bf16 (in, out); b*: f32 (1, out);
    # o: (tm, A_pad) bf16. All matmuls accumulate in f32 on the MXU.
    x = x_ref[...].astype(jnp.bfloat16)
    h = jnp.maximum(
        jnp.dot(x, w1_ref[...], preferred_element_type=jnp.float32) + b1_ref[...], 0.0
    ).astype(jnp.bfloat16)
    h = jnp.maximum(
        jnp.dot(h, w2_ref[...], preferred_element_type=jnp.float32) + b2_ref[...], 0.0
    ).astype(jnp.bfloat16)
    h = jnp.maximum(
        jnp.dot(h, w3_ref[...], preferred_element_type=jnp.float32) + b3_ref[...], 0.0
    ).astype(jnp.bfloat16)
    out = jnp.dot(h, w4_ref[...], preferred_element_type=jnp.float32) + b4_ref[...]
    o_ref[...] = out.astype(o_ref.dtype)


def _pick_block_m(B):
    """Batch tile sized to the workload (multiple of 16 for bf16 sublane packing)."""
    if B >= 256:
        # >= 2 grid steps so dimension_semantics=("parallel",) can engage the second
        # TensorCore on v7x; cap at 512 rows so the (tm, 256) f32 intermediates stay small.
        # TODO(synk): consider dropping the cap to 64 on v5e if bundle dumps show
        #             vst-slot saturation / vreg spills of the f32 accumulators.
        return min(512, _round_up(-(-B // 2), 16))
    return _round_up(max(B, 1), 16)


def actor_forward(state, params, action_typesize, *, block_m=None):
    """state: (B, state_typesize) float32; params: dict of bf16 weights / f32 biases.

    Returns (B, action_typesize) float32 logits, matching
    relu(fc1) -> relu(fc2) -> relu(fc3) -> fc4 of the PyTorch Actor.
    """
    B, S = state.shape
    A_pad = params["w4"].shape[1]                 # already padded to a multiple of 128
    tm = _pick_block_m(B) if block_m is None else block_m
    grid = (pl.cdiv(B, tm),)                      # partial last block handled by Pallas

    act_spec = pl.BlockSpec((tm, S), lambda i: (i, 0))
    out_spec = pl.BlockSpec((tm, A_pad), lambda i: (i, 0))

    def resident(shape):
        # Constant index_map: block revisited every grid step -> fetched once,
        # stays VMEM-resident across the batch tiles.
        return pl.BlockSpec(shape, lambda i: (0, 0))

    b_eff = grid[0] * tm
    flops = 2 * b_eff * (S * HIDDEN + 2 * HIDDEN * HIDDEN + HIDDEN * A_pad)
    weight_bytes = sum(int(v.size) * v.dtype.itemsize for v in params.values())
    bytes_accessed = B * S * state.dtype.itemsize + weight_bytes + B * A_pad * 2

    out = pl.pallas_call(
        _actor_kernel,
        out_shape=jax.ShapeDtypeStruct((B, A_pad), jnp.bfloat16),
        grid=grid,
        in_specs=[
            act_spec,
            resident(params["w1"].shape), resident(params["b1"].shape),
            resident(params["w2"].shape), resident(params["b2"].shape),
            resident(params["w3"].shape), resident(params["b3"].shape),
            resident(params["w4"].shape), resident(params["b4"].shape),
        ],
        out_specs=out_spec,
        compiler_params=pltpu.CompilerParams(
            dimension_semantics=("parallel",)),
        cost_estimate=pl.CostEstimate(
            flops=flops, transcendentals=0, bytes_accessed=bytes_accessed),
    )(state,
      params["w1"], params["b1"],
      params["w2"], params["b2"],
      params["w3"], params["b3"],
      params["w4"], params["b4"])

    # Drop the zero-padded output lanes; return f32 logits like the torch module.
    return out[:, :action_typesize].astype(jnp.float32)


def init_actor_params(state_typesize, action_typesize, key):
    """Deterministic synthetic init (shapes mirror the nn.Linear layers of Actor).

    Weights are stored pre-transposed (in, out) in bf16; biases in f32.
    The last layer is zero-padded to a 128-lane-dense output.
    """
    ks = jax.random.split(key, 8)
    a_pad = _round_up(action_typesize, LANE)

    def linear(kw, kb, fan_in, fan_out, pad_to=None):
        bound = 1.0 / jnp.sqrt(fan_in)       # torch nn.Linear default-ish init
        w = jax.random.uniform(kw, (fan_in, fan_out), jnp.float32, -bound, bound)
        b = jax.random.uniform(kb, (1, fan_out), jnp.float32, -bound, bound)
        if pad_to is not None and pad_to != fan_out:
            w = jnp.pad(w, ((0, 0), (0, pad_to - fan_out)))
            b = jnp.pad(b, ((0, 0), (0, pad_to - fan_out)))
        return w.astype(jnp.bfloat16), b.astype(jnp.float32)

    w1, b1 = linear(ks[0], ks[1], state_typesize, HIDDEN)
    w2, b2 = linear(ks[2], ks[3], HIDDEN, HIDDEN)
    w3, b3 = linear(ks[4], ks[5], HIDDEN, HIDDEN)
    w4, b4 = linear(ks[6], ks[7], HIDDEN, action_typesize, pad_to=a_pad)
    return {"w1": w1, "b1": b1, "w2": w2, "b2": b2,
            "w3": w3, "b3": b3, "w4": w4, "b4": b4}


def actor_reference(state, p, action_typesize):
    """Pure-JAX reference mirroring the kernel's numerics (bf16 matmuls, f32 acc, bf16 out).

    Note: this validates internal consistency of the Pallas kernel, not bit-fidelity to
    the original f32 PyTorch module (bf16 quantization error is expected and accepted).
    """
    x = state.astype(jnp.bfloat16)
    h = jnp.maximum(
        jnp.dot(x, p["w1"], preferred_element_type=jnp.float32) + p["b1"], 0.0
    ).astype(jnp.bfloat16)
    h = jnp.maximum(
        jnp.dot(h, p["w2"], preferred_element_type=jnp.float32) + p["b2"], 0.0
    ).astype(jnp.bfloat16)
    h = jnp.maximum(
        jnp.dot(h, p["w3"], preferred_element_type=jnp.float32) + p["b3"], 0.0
    ).astype(jnp.bfloat16)
    out = (jnp.dot(h, p["w4"], preferred_element_type=jnp.float32)
           + p["b4"]).astype(jnp.bfloat16)
    return out[:, :action_typesize].astype(jnp.float32)


if __name__ == "__main__":
    state_typesize = 8       # small discrete state feature size
    action_typesize = 4      # number of discrete actions
    batch = 2

    key = jax.random.PRNGKey(0)
    k_params, k_state = jax.random.split(key)
    params = init_actor_params(state_typesize, action_typesize, k_params)
    state = jax.random.normal(k_state, (batch, state_typesize), jnp.float32)

    fwd = jax.jit(functools.partial(actor_forward, action_typesize=action_typesize))
    out = fwd(state, params)
    out = jax.block_until_ready(out)

    ref = actor_reference(state, params, action_typesize)
    assert out.shape == (batch, action_typesize), out.shape
    assert jnp.allclose(out, ref, atol=1e-2, rtol=1e-2), "mismatch vs JAX reference"

    print("KERNEL_OK")
</pallas_src>

<mosaic_0001>
module attributes {stable_mosaic.version = 11 : i64} {
  func.func @_actor_kernel(%arg0: i32, %arg1: memref<16x8xf32, #tpu.memory_space<vmem>>, %arg2: memref<8x256xbf16, #tpu.memory_space<vmem>>, %arg3: memref<1x256xf32, #tpu.memory_space<vmem>>, %arg4: memref<256x256xbf16, #tpu.memory_space<vmem>>, %arg5: memref<1x256xf32, #tpu.memory_space<vmem>>, %arg6: memref<256x256xbf16, #tpu.memory_space<vmem>>, %arg7: memref<1x256xf32, #tpu.memory_space<vmem>>, %arg8: memref<256x128xbf16, #tpu.memory_space<vmem>>, %arg9: memref<1x128xf32, #tpu.memory_space<vmem>>, %arg10: memref<16x128xbf16, #tpu.memory_space<vmem>>) attributes {dimension_semantics = [#tpu.dimension_semantics<parallel>], iteration_bounds = array<i64: 1>, scalar_prefetch = 0 : i64, scratch_operands = 0 : i64, tpu.core_type = #tpu.core_type<tc>, window_params = [{transform_indices = @transform_0, window_bounds = array<i64: 16, 8>}, {pipeline_mode = #tpu.pipeline_mode<synchronous>, transform_indices = @transform_1, window_bounds = array<i64: 8, 256>}, {pipeline_mode = #tpu.pipeline_mode<synchronous>, transform_indices = @transform_2, window_bounds = array<i64: 1, 256>}, {pipeline_mode = #tpu.pipeline_mode<synchronous>, transform_indices = @transform_3, window_bounds = array<i64: 256, 256>}, {pipeline_mode = #tpu.pipeline_mode<synchronous>, transform_indices = @transform_4, window_bounds = array<i64: 1, 256>}, {pipeline_mode = #tpu.pipeline_mode<synchronous>, transform_indices = @transform_5, window_bounds = array<i64: 256, 256>}, {pipeline_mode = #tpu.pipeline_mode<synchronous>, transform_indices = @transform_6, window_bounds = array<i64: 1, 256>}, {pipeline_mode = #tpu.pipeline_mode<synchronous>, transform_indices = @transform_7, window_bounds = array<i64: 256, 128>}, {pipeline_mode = #tpu.pipeline_mode<synchronous>, transform_indices = @transform_8, window_bounds = array<i64: 1, 128>}, {transform_indices = @transform_9, window_bounds = array<i64: 16, 128>}]} {
    %c0 = arith.constant 0 : index
    %c0_0 = arith.constant 0 : index
    %0 = vector.load %arg1[%c0, %c0_0] : memref<16x8xf32, #tpu.memory_space<vmem>>, vector<16x8xf32>
    %1 = arith.truncf %0 : vector<16x8xf32> to vector<16x8xbf16>
    %c0_1 = arith.constant 0 : index
    %c0_2 = arith.constant 0 : index
    %2 = vector.load %arg2[%c0_1, %c0_2] : memref<8x256xbf16, #tpu.memory_space<vmem>>, vector<8x256xbf16>
    %cst = arith.constant dense<0.000000e+00> : vector<16x256xf32>
    %3 = tpu.matmul %1, %2, %cst {dimension_numbers = #tpu.dot_dimension_numbers<[1], [0], [0], [1], [0, 0, 1, 1], [], []>} : vector<16x8xbf16>, vector<8x256xbf16>, vector<16x256xf32> -> vector<16x256xf32>
    %c0_3 = arith.constant 0 : index
    %c0_4 = arith.constant 0 : index
    %4 = vector.load %arg3[%c0_3, %c0_4] : memref<1x256xf32, #tpu.memory_space<vmem>>, vector<1x256xf32>
    %5 = vector.broadcast %4 : vector<1x256xf32> to vector<16x256xf32>
    %6 = arith.addf %3, %5 : vector<16x256xf32>
    %cst_5 = arith.constant 0.000000e+00 : f32
    %7 = vector.broadcast %cst_5 : f32 to vector<16x256xf32>
    %8 = arith.maximumf %6, %7 : vector<16x256xf32>
    %9 = arith.truncf %8 : vector<16x256xf32> to vector<16x256xbf16>
    %c0_6 = arith.constant 0 : index
    %c0_7 = arith.constant 0 : index
    %10 = vector.load %arg4[%c0_6, %c0_7] : memref<256x256xbf16, #tpu.memory_space<vmem>>, vector<256x256xbf16>
    %cst_8 = arith.constant dense<0.000000e+00> : vector<16x256xf32>
    %11 = tpu.matmul %9, %10, %cst_8 {dimension_numbers = #tpu.dot_dimension_numbers<[1], [0], [0], [1], [0, 0, 1, 1], [], []>} : vector<16x256xbf16>, vector<256x256xbf16>, vector<16x256xf32> -> vector<16x256xf32>
    %c0_9 = arith.constant 0 : index
    %c0_10 = arith.constant 0 : index
    %12 = vector.load %arg5[%c0_9, %c0_10] : memref<1x256xf32, #tpu.memory_space<vmem>>, vector<1x256xf32>
    %13 = vector.broadcast %12 : vector<1x256xf32> to vector<16x256xf32>
    %14 = arith.addf %11, %13 : vector<16x256xf32>
    %cst_11 = arith.constant 0.000000e+00 : f32
    %15 = vector.broadcast %cst_11 : f32 to vector<16x256xf32>
    %16 = arith.maximumf %14, %15 : vector<16x256xf32>
    %17 = arith.truncf %16 : vector<16x256xf32> to vector<16x256xbf16>
    %c0_12 = arith.constant 0 : index
    %c0_13 = arith.constant 0 : index
    %18 = vector.load %arg6[%c0_12, %c0_13] : memref<256x256xbf16, #tpu.memory_space<vmem>>, vector<256x256xbf16>
    %cst_14 = arith.constant dense<0.000000e+00> : vector<16x256xf32>
    %19 = tpu.matmul %17, %18, %cst_14 {dimension_numbers = #tpu.dot_dimension_numbers<[1], [0], [0], [1], [0, 0, 1, 1], [], []>} : vector<16x256xbf16>, vector<256x256xbf16>, vector<16x256xf32> -> vector<16x256xf32>
    %c0_15 = arith.constant 0 : index
    %c0_16 = arith.constant 0 : index
    %20 = vector.load %arg7[%c0_15, %c0_16] : memref<1x256xf32, #tpu.memory_space<vmem>>, vector<1x256xf32>
    %21 = vector.broadcast %20 : vector<1x256xf32> to vector<16x256xf32>
    %22 = arith.addf %19, %21 : vector<16x256xf32>
    %cst_17 = arith.constant 0.000000e+00 : f32
    %23 = vector.broadcast %cst_17 : f32 to vector<16x256xf32>
    %24 = arith.maximumf %22, %23 : vector<16x256xf32>
    %25 = arith.truncf %24 : vector<16x256xf32> to vector<16x256xbf16>
    %c0_18 = arith.constant 0 : index
    %c0_19 = arith.constant 0 : index
    %26 = vector.load %arg8[%c0_18, %c0_19] : memref<256x128xbf16, #tpu.memory_space<vmem>>, vector<256x128xbf16>
    %cst_20 = arith.constant dense<0.000000e+00> : vector<16x128xf32>
    %27 = tpu.matmul %25, %26, %cst_20 {dimension_numbers = #tpu.dot_dimension_numbers<[1], [0], [0], [1], [0, 0, 1, 1], [], []>} : vector<16x256xbf16>, vector<256x128xbf16>, vector<16x128xf32> -> vector<16x128xf32>
    %c0_21 = arith.constant 0 : index
    %c0_22 = arith.constant 0 : index
    %28 = vector.load %arg9[%c0_21, %c0_22] : memref<1x128xf32, #tpu.memory_space<vmem>>, vector<1x128xf32>
    %29 = vector.broadcast %28 : vector<1x128xf32> to vector<16x128xf32>
    %30 = arith.addf %27, %29 : vector<16x128xf32>
    %31 = arith.truncf %30 : vector<16x128xf32> to vector<16x128xbf16>
    %c0_23 = arith.constant 0 : index
    %c0_24 = arith.constant 0 : index
    %32 = vector.load %arg10[%c0_23, %c0_24] : memref<16x128xbf16, #tpu.memory_space<vmem>>, vector<16x128xbf16>
    tpu.vector_store %arg10[%c0_23, %c0_24], %31 {strides = array<i32>} : memref<16x128xbf16, #tpu.memory_space<vmem>>, vector<16x128xbf16>,
    return
  }
  func.func @transform_0(%arg0: i32) -> (i32, i32) {
    %c0_i32 = arith.constant 0 : i32
    %c0_i32_0 = arith.constant 0 : i32
    return %arg0, %c0_i32 : i32, i32
  }
  func.func @transform_1(%arg0: i32) -> (i32, i32) {
    %c0_i32 = arith.constant 0 : i32
    %c0_i32_0 = arith.constant 0 : i32
    %c0_i32_1 = arith.constant 0 : i32
    return %c0_i32, %c0_i32_0 : i32, i32
  }
  func.func @transform_2(%arg0: i32) -> (i32, i32) {
    %c0_i32 = arith.constant 0 : i32
    %c0_i32_0 = arith.constant 0 : i32
    %c0_i32_1 = arith.constant 0 : i32
    return %c0_i32, %c0_i32_0 : i32, i32
  }
  func.func @transform_3(%arg0: i32) -> (i32, i32) {
    %c0_i32 = arith.constant 0 : i32
    %c0_i32_0 = arith.constant 0 : i32
    %c0_i32_1 = arith.constant 0 : i32
    return %c0_i32, %c0_i32_0 : i32, i32
  }
  func.func @transform_4(%arg0: i32) -> (i32, i32) {
    %c0_i32 = arith.constant 0 : i32
    %c0_i32_0 = arith.constant 0 : i32
    %c0_i32_1 = arith.constant 0 : i32
    return %c0_i32, %c0_i32_0 : i32, i32
  }
  func.func @transform_5(%arg0: i32) -> (i32, i32) {
    %c0_i32 = arith.constant 0 : i32
    %c0_i32_0 = arith.constant 0 : i32
    %c0_i32_1 = arith.constant 0 : i32
    return %c0_i32, %c0_i32_0 : i32, i32
  }
  func.func @transform_6(%arg0: i32) -> (i32, i32) {
    %c0_i32 = arith.constant 0 : i32
    %c0_i32_0 = arith.constant 0 : i32
    %c0_i32_1 = arith.constant 0 : i32
    return %c0_i32, %c0_i32_0 : i32, i32
  }
  func.func @transform_7(%arg0: i32) -> (i32, i32) {
    %c0_i32 = arith.constant 0 : i32
    %c0_i32_0 = arith.constant 0 : i32
    %c0_i32_1 = arith.constant 0 : i32
    return %c0_i32, %c0_i32_0 : i32, i32
  }
  func.func @transform_8(%arg0: i32) -> (i32, i32) {
    %c0_i32 = arith.constant 0 : i32
    %c0_i32_0 = arith.constant 0 : i32
    %c0_i32_1 = arith.constant 0 : i32
    return %c0_i32, %c0_i32_0 : i32, i32
  }
  func.func @transform_9(%arg0: i32) -> (i32, i32) {
    %c0_i32 = arith.constant 0 : i32
    %c0_i32_0 = arith.constant 0 : i32
    return %arg0, %c0_i32 : i32, i32
  }
}

</mosaic_0001>

<llo_original>
// kernel: actor_forward.1
$region0: #{actor_forward.1}
  #allocation0 [shape = 'u32[]', space=smem, size = 0x4, offset = 0x4, fixed_abs, tag = 'smem constant byte address 0x4 - core index']
  #allocation1 [shape = 'u32[144,128]{1,0:T(1,128)}', space=vmem, size = 0x12000, scoped, tag = 'internal scratch']
  %s0 = inlined_call_operand.hbm [shape: f32[2,8], index: 0, kind: input, shape index: {}]
  %s1 = inlined_call_operand.vmem [shape: bf16[8,256], index: 1, kind: input, shape index: {}]
  %s2 = inlined_call_operand.hbm [shape: f32[1,256], index: 2, kind: input, shape index: {}]
  %s3 = inlined_call_operand.hbm [shape: bf16[256,256], index: 3, kind: input, shape index: {}]
  %s4 = inlined_call_operand.hbm [shape: f32[1,256], index: 4, kind: input, shape index: {}]
  %s5 = inlined_call_operand.hbm [shape: bf16[256,256], index: 5, kind: input, shape index: {}]
  %s6 = inlined_call_operand.hbm [shape: f32[1,256], index: 6, kind: input, shape index: {}]
  %s7 = inlined_call_operand.hbm [shape: bf16[256,128], index: 7, kind: input, shape index: {}]
  %s8 = inlined_call_operand.vmem [shape: f32[1,128], index: 8, kind: input, shape index: {}]
  %s9 = inlined_call_operand.vmem [shape: bf16[2,128], index: 9, kind: output, shape index: {}]
  %s10 = sld [smem:[#allocation0]]
  $region104: #{actor_forward.1} parent=0
    _
  %s12 = ssub.s32 1, %s10
  %s13 = scalar_select 0, %s12, %s10
  $region1: #{actor_forward.1} parent=0
    #allocation2 [shape = 'u8[8192]{0}', space=vmem, size = 0x2000, scoped, tag = 'input window, operand 0, single buffered']
    #allocation3 [shape = 's32[1]{0}', space=sflag, size = 0x4, scoped, tag = 'scoped memory for actor_forward.1']
    #allocation4 [shape = 'u8[1024]{0}', space=vmem, size = 0x400, scoped, tag = 'input window, operand 2, single buffered']
    #allocation5 [shape = 's32[1]{0}', space=sflag, size = 0x4, scoped, tag = 'scoped memory for actor_forward.1']
    #allocation6 [shape = 'u8[131072]{0}', space=vmem, size = 0x20000, scoped, tag = 'input window, operand 3, single buffered']
    #allocation7 [shape = 'u8[1024]{0}', space=vmem, size = 0x400, scoped, tag = 'input window, operand 4, single buffered']
    #allocation8 [shape = 's32[1]{0}', space=sflag, size = 0x4, scoped, tag = 'scoped memory for actor_forward.1']
    #allocation9 [shape = 'u8[131072]{0}', space=vmem, size = 0x20000, scoped, tag = 'input window, operand 5, single buffered']
    #allocation10 [shape = 'u8[1024]{0}', space=vmem, size = 0x400, scoped, tag = 'input window, operand 6, single buffered']
    #allocation11 [shape = 's32[1]{0}', space=sflag, size = 0x4, scoped, tag = 'scoped memory for actor_forward.1']
    #allocation12 [shape = 'u8[65536]{0}', space=vmem, size = 0x10000, scoped, tag = 'input window, operand 7, single buffered']
    #allocation13 [shape = 'u8[4096]{0}', space=vmem, size = 0x1000, scoped, tag = 'output window, operand 0, single buffered']
    %14 = vsyncpa [#allocation3], 0
    %15 = vsyncpa [#allocation5], 0
    %16 = vsyncpa [#allocation8], 0
    %17 = vsyncpa [#allocation11], 0
    // Predicated region
    $region2: #{actor_forward.1} parent=1 // pred_check
      _
    $region3: #{actor_forward.1} parent=1 // pred_check_branch
      %19 = sbr.rel (0) target = $region5
    $region4: #{actor_forward.1} parent=1 // pred_region
      %s21 = ssub.s32 256, 32
      %22 = vsyncadd [#allocation3], %s21
      %s23 = sshll.u32 [#allocation2], 4
      %s24 = int_to_ptr.vmem [resolvable:$true] %s23
      %29 = dma.hbm_to_vmem [thread:$0]  %s0, 32, %s24, [#allocation3], 32, 32, 2
    $region5: #{actor_forward.1} parent=1 // pred_fallthru
      _
    // Predicated region
    $region6: #{actor_forward.1} parent=1 // pred_check
      _
    $region7: #{actor_forward.1} parent=1 // pred_check_branch
      %31 = sbr.rel (0) target = $region9
    $region8: #{actor_forward.1} parent=1 // pred_region
      _
    $region9: #{actor_forward.1} parent=1 // pred_fallthru
      _
    // Predicated region
    $region10: #{actor_forward.1} parent=1 // pred_check
      _
    $region11: #{actor_forward.1} parent=1 // pred_check_branch
      %33 = sbr.rel (0) target = $region13
    $region12: #{actor_forward.1} parent=1 // pred_region
      %s35 = ssub.s32 32, 32
      %36 = vsyncadd [#allocation5], %s35
      %s38 = sshll.u32 [#allocation4], 4
      %s39 = int_to_ptr.vmem [resolvable:$true] %s38
      %41 = dma.hbm_to_vmem [thread:$0]  %s2, 32, %s39, [#allocation5]
    $region13: #{actor_forward.1} parent=1 // pred_fallthru
      _
    // Predicated region
    $region14: #{actor_forward.1} parent=1 // pred_check
      _
    $region15: #{actor_forward.1} parent=1 // pred_check_branch
      %43 = sbr.rel (0) target = $region17
    $region16: #{actor_forward.1} parent=1 // pred_region
      %s45 = ssub.s32 4096, 4096
      %46 = vsyncadd [#allocation5], %s45
      %s47 = sshll.u32 [#allocation6], 4
      %s48 = int_to_ptr.vmem [resolvable:$true] %s47
      %53 = dma.hbm_to_vmem [thread:$0]  %s3, 4096, %s48, [#allocation5], 128, 128, 8
    $region17: #{actor_forward.1} parent=1 // pred_fallthru
      _
    // Predicated region
    $region18: #{actor_forward.1} parent=1 // pred_check
      _
    $region19: #{actor_forward.1} parent=1 // pred_check_branch
      %55 = sbr.rel (0) target = $region21
    $region20: #{actor_forward.1} parent=1 // pred_region
      %s57 = ssub.s32 32, 32
      %58 = vsyncadd [#allocation8], %s57
      %s60 = sshll.u32 [#allocation7], 4
      %s61 = int_to_ptr.vmem [resolvable:$true] %s60
      %63 = dma.hbm_to_vmem [thread:$0]  %s4, 32, %s61, [#allocation8]
    $region21: #{actor_forward.1} parent=1 // pred_fallthru
      _
    // Predicated region
    $region22: #{actor_forward.1} parent=1 // pred_check
      _
    $region23: #{actor_forward.1} parent=1 // pred_check_branch
      %65 = sbr.rel (0) target = $region25
    $region24: #{actor_forward.1} parent=1 // pred_region
      %s67 = ssub.s32 4096, 4096
      %68 = vsyncadd [#allocation8], %s67
      %s69 = sshll.u32 [#allocation9], 4
      %s70 = int_to_ptr.vmem [resolvable:$true] %s69
      %75 = dma.hbm_to_vmem [thread:$0]  %s5, 4096, %s70, [#allocation8], 128, 128, 8
    $region25: #{actor_forward.1} parent=1 // pred_fallthru
      _
    // Predicated region
    $region26: #{actor_forward.1} parent=1 // pred_check
      _
    $region27: #{actor_forward.1} parent=1 // pred_check_branch
      %77 = sbr.rel (0) target = $region29
    $region28: #{actor_forward.1} parent=1 // pred_region
      %s79 = ssub.s32 32, 32
      %80 = vsyncadd [#allocation11], %s79
      %s82 = sshll.u32 [#allocation10], 4
      %s83 = int_to_ptr.vmem [resolvable:$true] %s82
      %85 = dma.hbm_to_vmem [thread:$0]  %s6, 32, %s83, [#allocation11]
    $region29: #{actor_forward.1} parent=1 // pred_fallthru
      _
    // Predicated region
    $region30: #{actor_forward.1} parent=1 // pred_check
      _
    $region31: #{actor_forward.1} parent=1 // pred_check_branch
      %87 = sbr.rel (0) target = $region33
    $region32: #{actor_forward.1} parent=1 // pred_region
      %s89 = ssub.s32 2048, 2048
      %90 = vsyncadd [#allocation11], %s89
      %s91 = sshll.u32 [#allocation12], 4
      %s92 = int_to_ptr.vmem [resolvable:$true] %s91
      %97 = dma.hbm_to_vmem [thread:$0]  %s7, 2048, %s92, [#allocation11], 64, 64, 4
    $region33: #{actor_forward.1} parent=1 // pred_fallthru
      _
    // Predicated region
    $region34: #{actor_forward.1} parent=1 // pred_check
      _
    $region35: #{actor_forward.1} parent=1 // pred_check_branch
      %99 = sbr.rel (0) target = $region37
    $region36: #{actor_forward.1} parent=1 // pred_region
      _
    $region37: #{actor_forward.1} parent=1 // pred_fallthru
      _
    // Predicated region
    $region38: #{actor_forward.1} parent=1 // pred_check
      _
    $region39: #{actor_forward.1} parent=1 // pred_check_branch
      %101 = sbr.rel (0) target = $region41
    $region40: #{actor_forward.1} parent=1 // pred_region
      %102 = dma.done [#allocation3], 256
    $region41: #{actor_forward.1} parent=1 // pred_fallthru
      _
    // Predicated region
    $region42: #{actor_forward.1} parent=1 // pred_check
      _
    $region43: #{actor_forward.1} parent=1 // pred_check_branch
      %104 = sbr.rel (0) target = $region45
    $region44: #{actor_forward.1} parent=1 // pred_region
      %105 = dma.done [#allocation5], 32
    $region45: #{actor_forward.1} parent=1 // pred_fallthru
      _
    // Predicated region
    $region46: #{actor_forward.1} parent=1 // pred_check
      _
    $region47: #{actor_forward.1} parent=1 // pred_check_branch
      %107 = sbr.rel (0) target = $region49
    $region48: #{actor_forward.1} parent=1 // pred_region
      %108 = dma.done [#allocation5], 4096
    $region49: #{actor_forward.1} parent=1 // pred_fallthru
      _
    // Predicated region
    $region50: #{actor_forward.1} parent=1 // pred_check
      _
    $region51: #{actor_forward.1} parent=1 // pred_check_branch
      %110 = sbr.rel (0) target = $region53
    $region52: #{actor_forward.1} parent=1 // pred_region
      %111 = dma.done [#allocation8], 32
    $region53: #{actor_forward.1} parent=1 // pred_fallthru
      _
    // Predicated region
    $region54: #{actor_forward.1} parent=1 // pred_check
      _
    $region55: #{actor_forward.1} parent=1 // pred_check_branch
      %113 = sbr.rel (0) target = $region57
    $region56: #{actor_forward.1} parent=1 // pred_region
      %114 = dma.done [#allocation8], 4096
    $region57: #{actor_forward.1} parent=1 // pred_fallthru
      _
    // Predicated region
    $region58: #{actor_forward.1} parent=1 // pred_check
      _
    $region59: #{actor_forward.1} parent=1 // pred_check_branch
      %116 = sbr.rel (0) target = $region61
    $region60: #{actor_forward.1} parent=1 // pred_region
      %117 = dma.done [#allocation11], 32
    $region61: #{actor_forward.1} parent=1 // pred_fallthru
      _
    // Predicated region
    $region62: #{actor_forward.1} parent=1 // pred_check
      _
    $region63: #{actor_forward.1} parent=1 // pred_check_branch
      %119 = sbr.rel (0) target = $region65
    $region64: #{actor_forward.1} parent=1 // pred_region
      %120 = dma.done [#allocation11], 2048
    $region65: #{actor_forward.1} parent=1 // pred_fallthru
      _
    %v122 = vld [vmem:[#allocation2] sm:$0xff]
    %v123 = vld [vmem:[#allocation2 + $0x8] sm:$0xff]
    %v124 = vpack.c.bf16 %v123, %v122
    %v125 = vld [vmem:[%s1] sm:$0xff]
    %v126 = vld [vmem:[#allocation4] sm:$0x3]
    %v128 = vlaneseq
    %v129 = vshrl.u32 %v128, 7
    %v130 = vsub.s32 0, %v129
    %v131 = vrot.slane %v126, %v130
    %v132 = vlaneseq
    %v133 = vshrl.u32 %v132, 7
    %v134 = vsub.s32 1, %v133
    %v135 = vrot.slane %v126, %v134
    %v139 = vunpack.c.l.b16 %v125
    %v140 = vunpack.c.h.b16 %v125
    %v141 = vpack.c.b16 %v139, %v139
    %v142 = vpack.c.b16 %v140, %v140
    %vm143 = vcmask 64512
    %v145 = vsel %vm143, %v124, 0
    %vm147 = vcmask 1043456
    %v149 = vsel %vm147, %v141, 0
    %v152 = vsel %vm147, %v142, 0
    %154 = vmatprep.subr.bf16.mxu0 0
    %155 = vmatpush1.bf16.msra.mxu0 0
    %156 = vmatprep.subr.bf16.mxu0 0
    %157 = vmatpush1.bf16.msra.mxu0 0
    %158 = vmatprep.subr.bf16.mxu0 0
    %159 = vmatpush1.bf16.msra.mxu0 0
    %160 = vmatprep.subr.bf16.mxu0 0
    %161 = vmatpush1.bf16.msra.mxu0 0
    %162 = vmatprep.subr.bf16.mxu0 0
    %163 = vmatpush1.bf16.msra.mxu0 0
    %164 = vmatprep.subr.bf16.mxu0 0
    %165 = vmatpush1.bf16.msra.mxu0 0
    %166 = vmatprep.subr.bf16.mxu0 0
    %167 = vmatpush1.bf16.msra.mxu0 0
    %168 = vmatprep.subr.bf16.mxu0 %v152
    %169 = vmatpush1.bf16.msra.mxu0 %v149
    %170 = vmatprep.subr.bf16.mxu0 0
    %171 = vmatpush2.bf16.msra.mxu0 0
    %172 = vmatprep.subr.bf16.mxu0 0
    %173 = vmatpush2.bf16.msra.mxu0 0
    %174 = vmatprep.subr.bf16.mxu0 0
    %175 = vmatpush2.bf16.msra.mxu0 0
    %176 = vmatprep.subr.bf16.mxu0 0
    %177 = vmatpush2.bf16.msra.mxu0 0
    %178 = vmatprep.subr.bf16.mxu0 0
    %179 = vmatpush2.bf16.msra.mxu0 0
    %180 = vmatprep.subr.bf16.mxu0 0
    %181 = vmatpush2.bf16.msra.mxu0 0
    %182 = vmatprep.subr.bf16.mxu0 0
    %183 = vmatpush2.bf16.msra.mxu0 0
    %184 = vmatprep.subr.bf16.mxu0 0
    %185 = vmatpush2.bf16.msra.mxu0 0
    %186 = vmatprep.mubr.bf16.mxu0 0
    %187 = vmatmul.mubr.bf16.gmra.mxu0 %v145
    %v188 = vpop.f32.mrf.mxu0
    %v189 = vadd.f32 %v131, %v188
    %v190 = vpop.f32.mrf.mxu0
    %v191 = vadd.f32 %v135, %v190
    %v192 = vpop.f32.mrf.mxu0
    %v193 = vadd.f32 %v131, %v192
    %v194 = vpop.f32.mrf.mxu0
    %v195 = vadd.f32 %v135, %v194
    %196 = vdwg.mxu0
    %v197 = vmax.f32 %v189, 0.0
    %v198 = vmax.f32 %v191, 0.0
    %v199 = vmax.f32 %v193, 0.0
    %v200 = vmax.f32 %v195, 0.0
    %v201 = vpack.c.bf16 %v199, %v197
    %v202 = vpack.c.bf16 %v200, %v198
    %v203 = vld [vmem:[#allocation6] sm:$0xff]
    %v204 = vld [vmem:[#allocation6 + $0x8] sm:$0xff]
    %v205 = vld [vmem:[#allocation6 + $0x10] sm:$0xff]
    %v206 = vld [vmem:[#allocation6 + $0x18] sm:$0xff]
    %v207 = vld [vmem:[#allocation6 + $0x20] sm:$0xff]
    %v208 = vld [vmem:[#allocation6 + $0x28] sm:$0xff]
    %v209 = vld [vmem:[#allocation6 + $0x30] sm:$0xff]
    %v210 = vld [vmem:[#allocation6 + $0x38] sm:$0xff]
    %v211 = vld [vmem:[#allocation6 + $0x40] sm:$0xff]
    %v212 = vld [vmem:[#allocation6 + $0x48] sm:$0xff]
    %v213 = vld [vmem:[#allocation6 + $0x50] sm:$0xff]
    %v214 = vld [vmem:[#allocation6 + $0x58] sm:$0xff]
    %v215 = vld [vmem:[#allocation6 + $0x60] sm:$0xff]
    %v216 = vld [vmem:[#allocation6 + $0x68] sm:$0xff]
    %v217 = vld [vmem:[#allocation6 + $0x70] sm:$0xff]
    %v218 = vld [vmem:[#allocation6 + $0x78] sm:$0xff]
    %v219 = vld [vmem:[#allocation6 + $0x80] sm:$0xff]
    %v220 = vld [vmem:[#allocation6 + $0x88] sm:$0xff]
    %v221 = vld [vmem:[#allocation6 + $0x90] sm:$0xff]
    %v222 = vld [vmem:[#allocation6 + $0x98] sm:$0xff]
    %v223 = vld [vmem:[#allocation6 + $0xa0] sm:$0xff]
    %v224 = vld [vmem:[#allocation6 + $0xa8] sm:$0xff]
    %v225 = vld [vmem:[#allocation6 + $0xb0] sm:$0xff]
    %v226 = vld [vmem:[#allocation6 + $0xb8] sm:$0xff]
    %v227 = vld [vmem:[#allocation6 + $0xc0] sm:$0xff]
    %v228 = vld [vmem:[#allocation6 + $0xc8] sm:$0xff]
    %v229 = vld [vmem:[#allocation6 + $0xd0] sm:$0xff]
    %v230 = vld [vmem:[#allocation6 + $0xd8] sm:$0xff]
    %v231 = vld [vmem:[#allocation6 + $0xe0] sm:$0xff]
    %v232 = vld [vmem:[#allocation6 + $0xe8] sm:$0xff]
    %v233 = vld [vmem:[#allocation6 + $0xf0] sm:$0xff]
    %v234 = vld [vmem:[#allocation6 + $0xf8] sm:$0xff]
    %v235 = vld [vmem:[#allocation7] sm:$0x3]
    %v237 = vlaneseq
    %v238 = vshrl.u32 %v237, 7
    %v239 = vsub.s32 0, %v238
    %v240 = vrot.slane %v235, %v239
    %v241 = vlaneseq
    %v242 = vshrl.u32 %v241, 7
    %v243 = vsub.s32 1, %v242
    %v244 = vrot.slane %v235, %v243
    %v279 = vunpack.c.l.b16 %v203
    %v280 = vunpack.c.h.b16 %v203
    %v281 = vunpack.c.l.b16 %v204
    %v282 = vunpack.c.h.b16 %v204
    %v283 = vunpack.c.l.b16 %v205
    %v284 = vunpack.c.h.b16 %v205
    %v285 = vunpack.c.l.b16 %v206
    %v286 = vunpack.c.h.b16 %v206
    %v287 = vunpack.c.l.b16 %v207
    %v288 = vunpack.c.h.b16 %v207
    %v289 = vunpack.c.l.b16 %v208
    %v290 = vunpack.c.h.b16 %v208
    %v291 = vunpack.c.l.b16 %v209
    %v292 = vunpack.c.h.b16 %v209
    %v293 = vunpack.c.l.b16 %v210
    %v294 = vunpack.c.h.b16 %v210
    %v295 = vunpack.c.l.b16 %v211
    %v296 = vunpack.c.h.b16 %v211
    %v297 = vunpack.c.l.b16 %v212
    %v298 = vunpack.c.h.b16 %v212
    %v299 = vunpack.c.l.b16 %v213
    %v300 = vunpack.c.h.b16 %v213
    %v301 = vunpack.c.l.b16 %v214
    %v302 = vunpack.c.h.b16 %v214
    %v303 = vunpack.c.l.b16 %v215
    %v304 = vunpack.c.h.b16 %v215
    %v305 = vunpack.c.l.b16 %v216
    %v306 = vunpack.c.h.b16 %v216
    %v307 = vunpack.c.l.b16 %v217
    %v308 = vunpack.c.h.b16 %v217
    %v309 = vunpack.c.l.b16 %v218
    %v310 = vunpack.c.h.b16 %v218
    %v311 = vunpack.c.l.b16 %v219
    %v312 = vunpack.c.h.b16 %v219
    %v313 = vunpack.c.l.b16 %v220
    %v314 = vunpack.c.h.b16 %v220
    %v315 = vunpack.c.l.b16 %v221
    %v316 = vunpack.c.h.b16 %v221
    %v317 = vunpack.c.l.b16 %v222
    %v318 = vunpack.c.h.b16 %v222
    %v319 = vunpack.c.l.b16 %v223
    %v320 = vunpack.c.h.b16 %v223
    %v321 = vunpack.c.l.b16 %v224
    %v322 = vunpack.c.h.b16 %v224
    %v323 = vunpack.c.l.b16 %v225
    %v324 = vunpack.c.h.b16 %v225
    %v325 = vunpack.c.l.b16 %v226
    %v326 = vunpack.c.h.b16 %v226
    %v327 = vunpack.c.l.b16 %v227
    %v328 = vunpack.c.h.b16 %v227
    %v329 = vunpack.c.l.b16 %v228
    %v330 = vunpack.c.h.b16 %v228
    %v331 = vunpack.c.l.b16 %v229
    %v332 = vunpack.c.h.b16 %v229
    %v333 = vunpack.c.l.b16 %v230
    %v334 = vunpack.c.h.b16 %v230
    %v335 = vunpack.c.l.b16 %v231
    %v336 = vunpack.c.h.b16 %v231
    %v337 = vunpack.c.l.b16 %v232
    %v338 = vunpack.c.h.b16 %v232
    %v339 = vunpack.c.l.b16 %v233
    %v340 = vunpack.c.h.b16 %v233
    %v341 = vunpack.c.l.b16 %v234
    %v342 = vunpack.c.h.b16 %v234
    %v343 = vpack.c.b16 %v281, %v279
    %v344 = vpack.c.b16 %v282, %v280
    %v345 = vpack.c.b16 %v285, %v283
    %v346 = vpack.c.b16 %v286, %v284
    %v347 = vpack.c.b16 %v289, %v287
    %v348 = vpack.c.b16 %v290, %v288
    %v349 = vpack.c.b16 %v293, %v291
    %v350 = vpack.c.b16 %v294, %v292
    %v351 = vpack.c.b16 %v297, %v295
    %v352 = vpack.c.b16 %v298, %v296
    %v353 = vpack.c.b16 %v301, %v299
    %v354 = vpack.c.b16 %v302, %v300
    %v355 = vpack.c.b16 %v305, %v303
    %v356 = vpack.c.b16 %v306, %v304
    %v357 = vpack.c.b16 %v309, %v307
    %v358 = vpack.c.b16 %v310, %v308
    %v359 = vpack.c.b16 %v313, %v311
    %v360 = vpack.c.b16 %v314, %v312
    %v361 = vpack.c.b16 %v317, %v315
    %v362 = vpack.c.b16 %v318, %v316
    %v363 = vpack.c.b16 %v321, %v319
    %v364 = vpack.c.b16 %v322, %v320
    %v365 = vpack.c.b16 %v325, %v323
    %v366 = vpack.c.b16 %v326, %v324
    %v367 = vpack.c.b16 %v329, %v327
    %v368 = vpack.c.b16 %v330, %v328
    %v369 = vpack.c.b16 %v333, %v331
    %v370 = vpack.c.b16 %v334, %v332
    %v371 = vpack.c.b16 %v337, %v335
    %v372 = vpack.c.b16 %v338, %v336
    %v373 = vpack.c.b16 %v341, %v339
    %v374 = vpack.c.b16 %v342, %v340
    %407 = vmatprep.subr.bf16.mxu0 %v358
    %408 = vmatpush1.bf16.msra.mxu0 %v357
    %409 = vmatprep.subr.bf16.mxu0 %v356
    %410 = vmatpush1.bf16.msra.mxu0 %v355
    %411 = vmatprep.subr.bf16.mxu0 %v354
    %412 = vmatpush1.bf16.msra.mxu0 %v353
    %413 = vmatprep.subr.bf16.mxu0 %v352
    %414 = vmatpush1.bf16.msra.mxu0 %v351
    %415 = vmatprep.subr.bf16.mxu0 %v350
    %416 = vmatpush1.bf16.msra.mxu0 %v349
    %417 = vmatprep.subr.bf16.mxu0 %v348
    %418 = vmatpush1.bf16.msra.mxu0 %v347
    %419 = vmatprep.subr.bf16.mxu0 %v346
    %420 = vmatpush1.bf16.msra.mxu0 %v345
    %421 = vmatprep.subr.bf16.mxu0 %v344
    %422 = vmatpush1.bf16.msra.mxu0 %v343
    %423 = vmatprep.subr.bf16.mxu0 %v374
    %424 = vmatpush2.bf16.msra.mxu0 %v373
    %425 = vmatprep.subr.bf16.mxu0 %v372
    %426 = vmatpush2.bf16.msra.mxu0 %v371
    %427 = vmatprep.subr.bf16.mxu0 %v370
    %428 = vmatpush2.bf16.msra.mxu0 %v369
    %429 = vmatprep.subr.bf16.mxu0 %v368
    %430 = vmatpush2.bf16.msra.mxu0 %v367
    %431 = vmatprep.subr.bf16.mxu0 %v366
    %432 = vmatpush2.bf16.msra.mxu0 %v365
    %433 = vmatprep.subr.bf16.mxu0 %v364
    %434 = vmatpush2.bf16.msra.mxu0 %v363
    %435 = vmatprep.subr.bf16.mxu0 %v362
    %436 = vmatpush2.bf16.msra.mxu0 %v361
    %437 = vmatprep.subr.bf16.mxu0 %v360
    %438 = vmatpush2.bf16.msra.mxu0 %v359
    %439 = vmatprep.mubr.bf16.mxu0 %v202
    %440 = vmatmul.mubr.bf16.gmra.mxu0 %v201
    %v441 = vpop.f32.mrf.mxu0
    %v442 = vadd.f32 %v240, %v441
    %v443 = vpop.f32.mrf.mxu0
    %v444 = vadd.f32 %v244, %v443
    %v445 = vpop.f32.mrf.mxu0
    %v446 = vadd.f32 %v240, %v445
    %v447 = vpop.f32.mrf.mxu0
    %v448 = vadd.f32 %v244, %v447
    %449 = vdwg.mxu0
    %v450 = vmax.f32 %v442, 0.0
    %v451 = vmax.f32 %v444, 0.0
    %v452 = vmax.f32 %v446, 0.0
    %v453 = vmax.f32 %v448, 0.0
    %v454 = vpack.c.bf16 %v452, %v450
    %v455 = vpack.c.bf16 %v453, %v451
    %v456 = vld [vmem:[#allocation9] sm:$0xff]
    %v457 = vld [vmem:[#allocation9 + $0x8] sm:$0xff]
    %v458 = vld [vmem:[#allocation9 + $0x10] sm:$0xff]
    %v459 = vld [vmem:[#allocation9 + $0x18] sm:$0xff]
    %v460 = vld [vmem:[#allocation9 + $0x20] sm:$0xff]
    %v461 = vld [vmem:[#allocation9 + $0x28] sm:$0xff]
    %v462 = vld [vmem:[#allocation9 + $0x30] sm:$0xff]
    %v463 = vld [vmem:[#allocation9 + $0x38] sm:$0xff]
    %v464 = vld [vmem:[#allocation9 + $0x40] sm:$0xff]
    %v465 = vld [vmem:[#allocation9 + $0x48] sm:$0xff]
    %v466 = vld [vmem:[#allocation9 + $0x50] sm:$0xff]
    %v467 = vld [vmem:[#allocation9 + $0x58] sm:$0xff]
    %v468 = vld [vmem:[#allocation9 + $0x60] sm:$0xff]
    %v469 = vld [vmem:[#allocation9 + $0x68] sm:$0xff]
    %v470 = vld [vmem:[#allocation9 + $0x70] sm:$0xff]
    %v471 = vld [vmem:[#allocation9 + $0x78] sm:$0xff]
    %v472 = vld [vmem:[#allocation9 + $0x80] sm:$0xff]
    %v473 = vld [vmem:[#allocation9 + $0x88] sm:$0xff]
    %v474 = vld [vmem:[#allocation9 + $0x90] sm:$0xff]
    %v475 = vld [vmem:[#allocation9 + $0x98] sm:$0xff]
    %v476 = vld [vmem:[#allocation9 + $0xa0] sm:$0xff]
    %v477 = vld [vmem:[#allocation9 + $0xa8] sm:$0xff]
    %v478 = vld [vmem:[#allocation9 + $0xb0] sm:$0xff]
    %v479 = vld [vmem:[#allocation9 + $0xb8] sm:$0xff]
    %v480 = vld [vmem:[#allocation9 + $0xc0] sm:$0xff]
    %v481 = vld [vmem:[#allocation9 + $0xc8] sm:$0xff]
    %v482 = vld [vmem:[#allocation9 + $0xd0] sm:$0xff]
    %v483 = vld [vmem:[#allocation9 + $0xd8] sm:$0xff]
    %v484 = vld [vmem:[#allocation9 + $0xe0] sm:$0xff]
    %v485 = vld [vmem:[#allocation9 + $0xe8] sm:$0xff]
    %v486 = vld [vmem:[#allocation9 + $0xf0] sm:$0xff]
    %v487 = vld [vmem:[#allocation9 + $0xf8] sm:$0xff]
    %v488 = vld [vmem:[#allocation10] sm:$0x3]
    %v490 = vlaneseq
    %v491 = vshrl.u32 %v490, 7
    %v492 = vsub.s32 0, %v491
    %v493 = vrot.slane %v488, %v492
    %v494 = vlaneseq
    %v495 = vshrl.u32 %v494, 7
    %v496 = vsub.s32 1, %v495
    %v497 = vrot.slane %v488, %v496
    %v532 = vunpack.c.l.b16 %v456
    %v533 = vunpack.c.h.b16 %v456
    %v534 = vunpack.c.l.b16 %v457
    %v535 = vunpack.c.h.b16 %v457
    %v536 = vunpack.c.l.b16 %v458
    %v537 = vunpack.c.h.b16 %v458
    %v538 = vunpack.c.l.b16 %v459
    %v539 = vunpack.c.h.b16 %v459
    %v540 = vunpack.c.l.b16 %v460
    %v541 = vunpack.c.h.b16 %v460
    %v542 = vunpack.c.l.b16 %v461
    %v543 = vunpack.c.h.b16 %v461
    %v544 = vunpack.c.l.b16 %v462
    %v545 = vunpack.c.h.b16 %v462
    %v546 = vunpack.c.l.b16 %v463
    %v547 = vunpack.c.h.b16 %v463
    %v548 = vunpack.c.l.b16 %v464
    %v549 = vunpack.c.h.b16 %v464
    %v550 = vunpack.c.l.b16 %v465
    %v551 = vunpack.c.h.b16 %v465
    %v552 = vunpack.c.l.b16 %v466
    %v553 = vunpack.c.h.b16 %v466
    %v554 = vunpack.c.l.b16 %v467
    %v555 = vunpack.c.h.b16 %v467
    %v556 = vunpack.c.l.b16 %v468
    %v557 = vunpack.c.h.b16 %v468
    %v558 = vunpack.c.l.b16 %v469
    %v559 = vunpack.c.h.b16 %v469
    %v560 = vunpack.c.l.b16 %v470
    %v561 = vunpack.c.h.b16 %v470
    %v562 = vunpack.c.l.b16 %v471
    %v563 = vunpack.c.h.b16 %v471
    %v564 = vunpack.c.l.b16 %v472
    %v565 = vunpack.c.h.b16 %v472
    %v566 = vunpack.c.l.b16 %v473
    %v567 = vunpack.c.h.b16 %v473
    %v568 = vunpack.c.l.b16 %v474
    %v569 = vunpack.c.h.b16 %v474
    %v570 = vunpack.c.l.b16 %v475
    %v571 = vunpack.c.h.b16 %v475
    %v572 = vunpack.c.l.b16 %v476
    %v573 = vunpack.c.h.b16 %v476
    %v574 = vunpack.c.l.b16 %v477
    %v575 = vunpack.c.h.b16 %v477
    %v576 = vunpack.c.l.b16 %v478
    %v577 = vunpack.c.h.b16 %v478
    %v578 = vunpack.c.l.b16 %v479
    %v579 = vunpack.c.h.b16 %v479
    %v580 = vunpack.c.l.b16 %v480
    %v581 = vunpack.c.h.b16 %v480
    %v582 = vunpack.c.l.b16 %v481
    %v583 = vunpack.c.h.b16 %v481
    %v584 = vunpack.c.l.b16 %v482
    %v585 = vunpack.c.h.b16 %v482
    %v586 = vunpack.c.l.b16 %v483
    %v587 = vunpack.c.h.b16 %v483
    %v588 = vunpack.c.l.b16 %v484
    %v589 = vunpack.c.h.b16 %v484
    %v590 = vunpack.c.l.b16 %v485
    %v591 = vunpack.c.h.b16 %v485
    %v592 = vunpack.c.l.b16 %v486
    %v593 = vunpack.c.h.b16 %v486
    %v594 = vunpack.c.l.b16 %v487
    %v595 = vunpack.c.h.b16 %v487
    %v596 = vpack.c.b16 %v534, %v532
    %v597 = vpack.c.b16 %v535, %v533
    %v598 = vpack.c.b16 %v538, %v536
    %v599 = vpack.c.b16 %v539, %v537
    %v600 = vpack.c.b16 %v542, %v540
    %v601 = vpack.c.b16 %v543, %v541
    %v602 = vpack.c.b16 %v546, %v544
    %v603 = vpack.c.b16 %v547, %v545
    %v604 = vpack.c.b16 %v550, %v548
    %v605 = vpack.c.b16 %v551, %v549
    %v606 = vpack.c.b16 %v554, %v552
    %v607 = vpack.c.b16 %v555, %v553
    %v608 = vpack.c.b16 %v558, %v556
    %v609 = vpack.c.b16 %v559, %v557
    %v610 = vpack.c.b16 %v562, %v560
    %v611 = vpack.c.b16 %v563, %v561
    %v612 = vpack.c.b16 %v566, %v564
    %v613 = vpack.c.b16 %v567, %v565
    %v614 = vpack.c.b16 %v570, %v568
    %v615 = vpack.c.b16 %v571, %v569
    %v616 = vpack.c.b16 %v574, %v572
    %v617 = vpack.c.b16 %v575, %v573
    %v618 = vpack.c.b16 %v578, %v576
    %v619 = vpack.c.b16 %v579, %v577
    %v620 = vpack.c.b16 %v582, %v580
    %v621 = vpack.c.b16 %v583, %v581
    %v622 = vpack.c.b16 %v586, %v584
    %v623 = vpack.c.b16 %v587, %v585
    %v624 = vpack.c.b16 %v590, %v588
    %v625 = vpack.c.b16 %v591, %v589
    %v626 = vpack.c.b16 %v594, %v592
    %v627 = vpack.c.b16 %v595, %v593
    %660 = vmatprep.subr.bf16.mxu0 %v611
    %661 = vmatpush1.bf16.msra.mxu0 %v610
    %662 = vmatprep.subr.bf16.mxu0 %v609
    %663 = vmatpush1.bf16.msra.mxu0 %v608
    %664 = vmatprep.subr.bf16.mxu0 %v607
    %665 = vmatpush1.bf16.msra.mxu0 %v606
    %666 = vmatprep.subr.bf16.mxu0 %v605
    %667 = vmatpush1.bf16.msra.mxu0 %v604
    %668 = vmatprep.subr.bf16.mxu0 %v603
    %669 = vmatpush1.bf16.msra.mxu0 %v602
    %670 = vmatprep.subr.bf16.mxu0 %v601
    %671 = vmatpush1.bf16.msra.mxu0 %v600
    %672 = vmatprep.subr.bf16.mxu0 %v599
    %673 = vmatpush1.bf16.msra.mxu0 %v598
    %674 = vmatprep.subr.bf16.mxu0 %v597
    %675 = vmatpush1.bf16.msra.mxu0 %v596
    %676 = vmatprep.subr.bf16.mxu0 %v627
    %677 = vmatpush2.bf16.msra.mxu0 %v626
    %678 = vmatprep.subr.bf16.mxu0 %v625
    %679 = vmatpush2.bf16.msra.mxu0 %v624
    %680 = vmatprep.subr.bf16.mxu0 %v623
    %681 = vmatpush2.bf16.msra.mxu0 %v622
    %682 = vmatprep.subr.bf16.mxu0 %v621
    %683 = vmatpush2.bf16.msra.mxu0 %v620
    %684 = vmatprep.subr.bf16.mxu0 %v619
    %685 = vmatpush2.bf16.msra.mxu0 %v618
    %686 = vmatprep.subr.bf16.mxu0 %v617
    %687 = vmatpush2.bf16.msra.mxu0 %v616
    %688 = vmatprep.subr.bf16.mxu0 %v615
    %689 = vmatpush2.bf16.msra.mxu0 %v614
    %690 = vmatprep.subr.bf16.mxu0 %v613
    %691 = vmatpush2.bf16.msra.mxu0 %v612
    %692 = vmatprep.mubr.bf16.mxu0 %v455
    %693 = vmatmul.mubr.bf16.gmra.mxu0 %v454
    %v694 = vpop.f32.mrf.mxu0
    %v695 = vadd.f32 %v493, %v694
    %v696 = vpop.f32.mrf.mxu0
    %v697 = vadd.f32 %v497, %v696
    %v698 = vpop.f32.mrf.mxu0
    %v699 = vadd.f32 %v493, %v698
    %v700 = vpop.f32.mrf.mxu0
    %v701 = vadd.f32 %v497, %v700
    %702 = vdwg.mxu0
    %v703 = vmax.f32 %v695, 0.0
    %v704 = vmax.f32 %v697, 0.0
    %v705 = vmax.f32 %v699, 0.0
    %v706 = vmax.f32 %v701, 0.0
    %v707 = vpack.c.bf16 %v705, %v703
    %v708 = vpack.c.bf16 %v706, %v704
    %v709 = vld [vmem:[#allocation12] sm:$0xf]
    %v710 = vld [vmem:[#allocation12 + $0x4] sm:$0xf]
    %v711 = vld [vmem:[#allocation12 + $0x8] sm:$0xf]
    %v712 = vld [vmem:[#allocation12 + $0xc] sm:$0xf]
    %v713 = vld [vmem:[#allocation12 + $0x10] sm:$0xf]
    %v714 = vld [vmem:[#allocation12 + $0x14] sm:$0xf]
    %v715 = vld [vmem:[#allocation12 + $0x18] sm:$0xf]
    %v716 = vld [vmem:[#allocation12 + $0x1c] sm:$0xf]
    %v717 = vld [vmem:[#allocation12 + $0x20] sm:$0xf]
    %v718 = vld [vmem:[#allocation12 + $0x24] sm:$0xf]
    %v719 = vld [vmem:[#allocation12 + $0x28] sm:$0xf]
    %v720 = vld [vmem:[#allocation12 + $0x2c] sm:$0xf]
    %v721 = vld [vmem:[#allocation12 + $0x30] sm:$0xf]
    %v722 = vld [vmem:[#allocation12 + $0x34] sm:$0xf]
    %v723 = vld [vmem:[#allocation12 + $0x38] sm:$0xf]
    %v724 = vld [vmem:[#allocation12 + $0x3c] sm:$0xf]
    %v725 = vld [vmem:[#allocation12 + $0x40] sm:$0xf]
    %v726 = vld [vmem:[#allocation12 + $0x44] sm:$0xf]
    %v727 = vld [vmem:[#allocation12 + $0x48] sm:$0xf]
    %v728 = vld [vmem:[#allocation12 + $0x4c] sm:$0xf]
    %v729 = vld [vmem:[#allocation12 + $0x50] sm:$0xf]
    %v730 = vld [vmem:[#allocation12 + $0x54] sm:$0xf]
    %v731 = vld [vmem:[#allocation12 + $0x58] sm:$0xf]
    %v732 = vld [vmem:[#allocation12 + $0x5c] sm:$0xf]
    %v733 = vld [vmem:[#allocation12 + $0x60] sm:$0xf]
    %v734 = vld [vmem:[#allocation12 + $0x64] sm:$0xf]
    %v735 = vld [vmem:[#allocation12 + $0x68] sm:$0xf]
    %v736 = vld [vmem:[#allocation12 + $0x6c] sm:$0xf]
    %v737 = vld [vmem:[#allocation12 + $0x70] sm:$0xf]
    %v738 = vld [vmem:[#allocation12 + $0x74] sm:$0xf]
    %v739 = vld [vmem:[#allocation12 + $0x78] sm:$0xf]
    %v740 = vld [vmem:[#allocation12 + $0x7c] sm:$0xf]
    %v741 = vld [vmem:[%s8] sm:$0x1]
    %v743 = vlaneseq
    %v744 = vshrl.u32 %v743, 7
    %v745 = vsub.s32 0, %v744
    %v746 = vrot.slane %v741, %v745
    %v780 = vunpack.c.l.b16 %v709
    %v781 = vunpack.c.l.b16 %v710
    %v782 = vunpack.c.l.b16 %v711
    %v783 = vunpack.c.l.b16 %v712
    %v784 = vunpack.c.l.b16 %v713
    %v785 = vunpack.c.l.b16 %v714
    %v786 = vunpack.c.l.b16 %v715
    %v787 = vunpack.c.l.b16 %v716
    %v788 = vunpack.c.l.b16 %v717
    %v789 = vunpack.c.l.b16 %v718
    %v790 = vunpack.c.l.b16 %v719
    %v791 = vunpack.c.l.b16 %v720
    %v792 = vunpack.c.l.b16 %v721
    %v793 = vunpack.c.l.b16 %v722
    %v794 = vunpack.c.l.b16 %v723
    %v795 = vunpack.c.l.b16 %v724
    %v796 = vunpack.c.l.b16 %v725
    %v797 = vunpack.c.l.b16 %v726
    %v798 = vunpack.c.l.b16 %v727
    %v799 = vunpack.c.l.b16 %v728
    %v800 = vunpack.c.l.b16 %v729
    %v801 = vunpack.c.l.b16 %v730
    %v802 = vunpack.c.l.b16 %v731
    %v803 = vunpack.c.l.b16 %v732
    %v804 = vunpack.c.l.b16 %v733
    %v805 = vunpack.c.l.b16 %v734
    %v806 = vunpack.c.l.b16 %v735
    %v807 = vunpack.c.l.b16 %v736
    %v808 = vunpack.c.l.b16 %v737
    %v809 = vunpack.c.l.b16 %v738
    %v810 = vunpack.c.l.b16 %v739
    %v811 = vunpack.c.l.b16 %v740
    %v812 = vpack.c.b16 %v781, %v780
    %v813 = vpack.c.b16 %v783, %v782
    %v814 = vpack.c.b16 %v785, %v784
    %v815 = vpack.c.b16 %v787, %v786
    %v816 = vpack.c.b16 %v789, %v788
    %v817 = vpack.c.b16 %v791, %v790
    %v818 = vpack.c.b16 %v793, %v792
    %v819 = vpack.c.b16 %v795, %v794
    %v820 = vpack.c.b16 %v797, %v796
    %v821 = vpack.c.b16 %v799, %v798
    %v822 = vpack.c.b16 %v801, %v800
    %v823 = vpack.c.b16 %v803, %v802
    %v824 = vpack.c.b16 %v805, %v804
    %v825 = vpack.c.b16 %v807, %v806
    %v826 = vpack.c.b16 %v809, %v808
    %v827 = vpack.c.b16 %v811, %v810
    %844 = vmatprep.subr.bf16.mxu0 0
    %845 = vmatpush1.bf16.msra.mxu0 %v819
    %846 = vmatprep.subr.bf16.mxu0 0
    %847 = vmatpush1.bf16.msra.mxu0 %v818
    %848 = vmatprep.subr.bf16.mxu0 0
    %849 = vmatpush1.bf16.msra.mxu0 %v817
    %850 = vmatprep.subr.bf16.mxu0 0
    %851 = vmatpush1.bf16.msra.mxu0 %v816
    %852 = vmatprep.subr.bf16.mxu0 0
    %853 = vmatpush1.bf16.msra.mxu0 %v815
    %854 = vmatprep.subr.bf16.mxu0 0
    %855 = vmatpush1.bf16.msra.mxu0 %v814
    %856 = vmatprep.subr.bf16.mxu0 0
    %857 = vmatpush1.bf16.msra.mxu0 %v813
    %858 = vmatprep.subr.bf16.mxu0 0
    %859 = vmatpush1.bf16.msra.mxu0 %v812
    %860 = vmatprep.subr.bf16.mxu0 0
    %861 = vmatpush2.bf16.msra.mxu0 %v827
    %862 = vmatprep.subr.bf16.mxu0 0
    %863 = vmatpush2.bf16.msra.mxu0 %v826
    %864 = vmatprep.subr.bf16.mxu0 0
    %865 = vmatpush2.bf16.msra.mxu0 %v825
    %866 = vmatprep.subr.bf16.mxu0 0
    %867 = vmatpush2.bf16.msra.mxu0 %v824
    %868 = vmatprep.subr.bf16.mxu0 0
    %869 = vmatpush2.bf16.msra.mxu0 %v823
    %870 = vmatprep.subr.bf16.mxu0 0
    %871 = vmatpush2.bf16.msra.mxu0 %v822
    %872 = vmatprep.subr.bf16.mxu0 0
    %873 = vmatpush2.bf16.msra.mxu0 %v821
    %874 = vmatprep.subr.bf16.mxu0 0
    %875 = vmatpush2.bf16.msra.mxu0 %v820
    %876 = vmatprep.mubr.bf16.mxu0 %v708
    %877 = vmatmul.mubr.bf16.gmra.mxu0 %v707
    %v878 = vpop.f32.mrf.mxu0
    %v879 = vadd.f32 %v746, %v878
    %v880 = vpop.f32.mrf.mxu0
    %v881 = vpop.f32.mrf.mxu0
    %v882 = vadd.f32 %v746, %v881
    %v883 = vpop.f32.mrf.mxu0
    %884 = vdwg.mxu0
    %v885 = vpack.c.bf16 %v882, %v879
    %v887 = vcombine.high %v885, %v885
    %v889 = vunpack.c.l.s4 1966171168
    %v890 = vunpack.c.0.s8 %v889
    %v891 = vlaneseq
    %v892 = vshrl.u32 %v891, 7
    %v893 = vsub.s32 %v890, %v892
    %v894 = vrot.slane %v885, %v893
    %v896 = vunpack.c.l.s4 1966171168
    %v897 = vunpack.c.0.s8 %v896
    %v898 = vlaneseq
    %v899 = vshrl.u32 %v898, 7
    %v900 = vsub.s32 %v897, %v899
    %v901 = vrot.slane %v887, %v900
    %v902 = vcombine.high %v894, %v894
    %v903 = vcombine.high %v901, %v901
    %v905 = vunpack.c.l.s4 1966171168
    %v906 = vunpack.c.0.s8 %v905
    %v907 = vlaneseq
    %v908 = vshrl.u32 %v907, 7
    %v909 = vsub.s32 %v906, %v908
    %v910 = vrot.slane %v894, %v909
    %v912 = vunpack.c.l.s4 1966171168
    %v913 = vunpack.c.0.s8 %v912
    %v914 = vlaneseq
    %v915 = vshrl.u32 %v914, 7
    %v916 = vsub.s32 %v913, %v915
    %v917 = vrot.slane %v901, %v916
    %v919 = vunpack.c.l.s4 1966171168
    %v920 = vunpack.c.0.s8 %v919
    %v921 = vlaneseq
    %v922 = vshrl.u32 %v921, 7
    %v923 = vsub.s32 %v920, %v922
    %v924 = vrot.slane %v902, %v923
    %v926 = vunpack.c.l.s4 1966171168
    %v927 = vunpack.c.0.s8 %v926
    %v928 = vlaneseq
    %v929 = vshrl.u32 %v928, 7
    %v930 = vsub.s32 %v927, %v929
    %v931 = vrot.slane %v903, %v930
    %v932 = vcombine.high %v910, %v910
    %v933 = vcombine.high %v917, %v917
    %v934 = vcombine.high %v924, %v924
    %v935 = vcombine.high %v931, %v931
    %944 = vst [vmem:[#allocation13] sm:$0x1] %v910
    %945 = vst [vmem:[#allocation13 + $0x1] sm:$0x1] %v924
    %946 = vst [vmem:[#allocation13 + $0x2] sm:$0x1] %v932
    %947 = vst [vmem:[#allocation13 + $0x3] sm:$0x1] %v934
    %948 = vst [vmem:[#allocation13 + $0x4] sm:$0x1] %v917
    %949 = vst [vmem:[#allocation13 + $0x5] sm:$0x1] %v931
    %950 = vst [vmem:[#allocation13 + $0x6] sm:$0x1] %v933
    %951 = vst [vmem:[#allocation13 + $0x7] sm:$0x1] %v935
    // Predicated region
    $region66: #{actor_forward.1} parent=1 // pred_check
      _
    $region67: #{actor_forward.1} parent=1 // pred_check_branch
      %953 = sbr.rel (0) target = $region69
    $region68: #{actor_forward.1} parent=1 // pred_region
      // Predicated region
      $region70: #{actor_forward.1} parent=68 // pred_check
        _
      $region71: #{actor_forward.1} parent=68 // pred_check_branch
        %955 = sbr.rel (0) target = $region73
      $region72: #{actor_forward.1} parent=68 // pred_region
        // Predicated region
        $region74: #{actor_forward.1} parent=72 // pred_check
          _
        $region75: #{actor_forward.1} parent=72 // pred_check_branch
          %957 = sbr.rel target = $region77
        $region76: #{actor_forward.1} parent=72 // pred_region
          // Predicated region
          $region89: #{actor_forward.1} parent=76 // pred_check
            _
          $region90: #{actor_forward.1} parent=76 // pred_check_branch
            %973 = sbr.rel (0) target = $region92
          $region91: #{actor_forward.1} parent=76 // pred_region
            %s975 = ssub.s32 2, 1
            loop: start=0, step=1, limit=1
            $region93: #{actor_forward.1} parent=91 // loop_pre_header
              _
            $region94: #{actor_forward.1} parent=91 // loop_header
              %s977 = sphi 0, %s981
              %p978 = scmp.ge.s32.totalorder %s977, 1
              %s982 = sphi [#allocation13], [#allocation13]
              %s983 = sphi %s9, %s9
            $region95: #{actor_forward.1} parent=91 // loop_header_branch
              %980 = sbr.rel (%p978) target = $region99
            $region96: #{actor_forward.1} parent=91 // loop_body
              %v984 = vld [vmem:[%s982] sm:%s975]
              %985 = vst [vmem:[%s983] sm:%s975] %v984
            $region97: #{actor_forward.1} parent=91 // loop_footer
              %s981 = sadd.s32 1, %s977
            $region98: #{actor_forward.1} parent=91 // loop_footer_branch
              %976 = sbr.rel target = $region94
            $region99: #{actor_forward.1} parent=91 // loop_exit
              _
          $region92: #{actor_forward.1} parent=76 // pred_fallthru
            _
        $region77: #{actor_forward.1} parent=72 // pred_fallthru
          _
        // Predicated region
        $region78: #{actor_forward.1} parent=72 // pred_check
          _
        $region79: #{actor_forward.1} parent=72 // pred_check_branch
          %959 = sbr.rel (0) target = $region81
        $region80: #{actor_forward.1} parent=72 // pred_region
          %s961 = ssub.s32 2, 1
          loop: start=0, step=1, limit=1
          $region82: #{actor_forward.1} parent=80 // loop_pre_header
            _
          $region83: #{actor_forward.1} parent=80 // loop_header
            %s963 = sphi 0, %s967
            %p964 = scmp.ge.s32.totalorder %s963, 1
            %s968 = sphi [#allocation13], [#allocation13]
            %s969 = sphi %s9, %s9
          $region84: #{actor_forward.1} parent=80 // loop_header_branch
            %966 = sbr.rel (%p964) target = $region88
          $region85: #{actor_forward.1} parent=80 // loop_body
            %v970 = vld [vmem:[%s968] sm:%s961]
            %971 = vst [vmem:[%s969] sm:%s961] %v970
          $region86: #{actor_forward.1} parent=80 // loop_footer
            %s967 = sadd.s32 1, %s963
          $region87: #{actor_forward.1} parent=80 // loop_footer_branch
            %962 = sbr.rel target = $region83
          $region88: #{actor_forward.1} parent=80 // loop_exit
            _
        $region81: #{actor_forward.1} parent=72 // pred_fallthru
          _
      $region73: #{actor_forward.1} parent=68 // pred_fallthru
        _
      %986 = vnop
    $region69: #{actor_forward.1} parent=1 // pred_fallthru
      _
    // Predicated region
    $region100: #{actor_forward.1} parent=1 // pred_check
      _
    $region101: #{actor_forward.1} parent=1 // pred_check_branch
      %988 = sbr.rel (0) target = $region103
    $region102: #{actor_forward.1} parent=1 // pred_region
      _
    $region103: #{actor_forward.1} parent=1 // pred_fallthru
      _
    %989 = vsyncpa [#allocation3], 1
    %990 = vsyncpa [#allocation5], 1
    %991 = vsyncpa [#allocation8], 1
    %992 = vsyncpa [#allocation11], 1

</llo_original>
